<compile_context>
chip_gen: v5e
topology: v5e:2x2
jax: 0.10.0
libtpu: 0.0.40
codegen_flags: <defaults>
</compile_context>

<pallas_src>
import jax
import jax.numpy as jnp
from jax.experimental import pallas as pl
from jax.experimental.pallas import tpu as pltpu

EPS = 1e-8          # matches nn.BatchNorm1d(dim_in*q, eps=1e-08) in the module
LANE = 128


def _round_up(n, m):
    return ((n + m - 1) // m) * m


def _pad_to(a, shape):
    pads = [(0, s - d) for d, s in zip(a.shape, shape)]
    if all(p == (0, 0) for p in pads):
        return a
    return jnp.pad(a, pads)


# ---------------------------------------------------------------------------
# Fused Pallas kernel: the whole Multilevel_Net forward in one pallas_call.
# Everything is VMEM-resident (tiny tensors), no grid needed.
# ---------------------------------------------------------------------------
def _bn_relu(stack, gamma_row, beta_row, inv_b):
    # Shifted one-pass batch stats: var(x) = E[(x-c)^2] - (E[x-c])^2, c = row 0.
    # Both reductions are independent (XLU ILP) and the shift keeps them well
    # conditioned for deeper levels; max(.,0) guards the tiny negative case.
    c = stack[0:1, :]
    d = stack - c
    s1 = jnp.sum(d, axis=0, keepdims=True)
    s2 = jnp.sum(d * d, axis=0, keepdims=True)
    mean_d = s1 * inv_b
    var = jnp.maximum(s2 * inv_b - mean_d * mean_d, 0.0)
    y = (d - mean_d) * jax.lax.rsqrt(var + EPS)
    y = y * gamma_row + beta_row
    return jnp.maximum(y, 0.0)


def make_fused_kernel(lvls, batch, h_pad, max_skips, matmul_dtype):
    """lvls = [Level-1, Level-2, ..., 0]; first net is Deepest_Net (no skip in)."""
    inv_b = 1.0 / float(batch)
    md = matmul_dtype

    def kernel(*refs):
        refs = list(refs)
        x_ref = refs.pop(0)              # (B, D_pad), already in matmul dtype
        w_in_all_ref = refs.pop(0)       # (D_pad, num_nets*H_pad), matmul dtype
        w_out_all_ref = refs.pop(0)      # (num_nets, H_pad), f32
        b_out_sum_ref = refs.pop(0)      # SMEM (1,), pre-summed biases
        skip_ref = refs.pop()            # VMEM scratch (2*max_skips, B, H_pad)
        out_ref = refs.pop()             # (B, 1)

        # One wide MXU op covering every sub-net's input_layer at once.
        stack0_all = jnp.dot(x_ref[...], w_in_all_ref[...],
                             preferred_element_type=jnp.float32)

        out_acc = jnp.zeros((batch, h_pad), jnp.float32)
        for n, lvl in enumerate(lvls):
            n_steps = 2 ** lvl
            n_hid = n_steps - 1
            w_hid_ref = refs.pop(0) if n_hid > 0 else None
            gamma_ref = refs.pop(0)
            beta_ref = refs.pop(0)
            add_skip = n > 0                       # deepest net has no skip in
            w_base = (n % 2) * max_skips           # ping-pong skip buffers:
            r_base = ((n - 1) % 2) * max_skips     # write one, read the other

            # Static 128-lane slice of the fused input-layer result.
            stack = stack0_all[:, n * h_pad:(n + 1) * h_pad]

            for i in range(1, n_steps):
                stack = _bn_relu(stack, gamma_ref[i - 1:i, :],
                                 beta_ref[i - 1:i, :], inv_b)
                # w_hid already pre-cast to md in the wrapper; only the f32
                # BN output needs a cast for the MXU feed.
                stack = jnp.dot(stack.astype(md), w_hid_ref[i - 1],
                                preferred_element_type=jnp.float32)
                if i % 2 == 0:
                    # Skip is stored BEFORE the incoming-skip add (as in torch).
                    skip_ref[w_base + i // 2 - 1] = stack
                if add_skip:
                    stack = stack + skip_ref[r_base + i - 1]

            stack = _bn_relu(stack, gamma_ref[n_steps - 1:n_steps, :],
                             beta_ref[n_steps - 1:n_steps, :], inv_b)
            # Deferred output layer: one VPU FMA per net; the single cross-lane
            # reduction and the scalar bias happen once in the epilogue.
            out_acc = out_acc + stack * w_out_all_ref[n:n + 1, :]

        out = jnp.sum(out_acc, axis=-1, keepdims=True) + b_out_sum_ref[0]
        out_ref[...] = out.astype(out_ref.dtype)

    return kernel


# ---------------------------------------------------------------------------
# Wrapper: zero-pad feature dims to 128 lanes, pre-cast matmul operands,
# and launch the fused kernel.
# ---------------------------------------------------------------------------
def multilevel_forward(all_params, x, level, *, matmul_dtype=jnp.bfloat16):
    """Fused Multilevel_Net forward as a single grid-less pallas_call.

    NOTE (v7x): BatchNorm couples the batch dim and the level chain is strictly
    sequential, so there is no parallel grid axis; this kernel occupies one
    TensorCore.  Run independent forward passes concurrently (vmap / XLA-level
    sharding) to fill both v7x cores.
    """
    lvls = [level - 1] + list(range(level - 2, -1, -1))
    num_nets = len(lvls)
    B, dim_in = x.shape
    H = all_params[0]["w_in"].shape[1]
    D_pad = _round_up(dim_in, LANE)
    H_pad = _round_up(H, LANE)
    md = matmul_dtype

    vmem = pl.BlockSpec(memory_space=pltpu.MemorySpace.VMEM)
    smem = pl.BlockSpec(memory_space=pltpu.MemorySpace.SMEM)

    # Input pre-cast once to the matmul dtype (BN math stays f32 in-kernel).
    # TODO(synk): for bf16, a (B,128) operand with B=8 half-fills the (16,128)
    # bf16 vreg; padding B would change BatchNorm statistics, so we accept it.
    x_p = _pad_to(x.astype(jnp.float32), (B, D_pad)).astype(md)

    # All input_layer weights fused into one [D_pad, num_nets*H_pad] operand,
    # pre-cast in the wrapper (zero-padding keeps padded lanes inert).
    w_in_all = jnp.concatenate(
        [_pad_to(p["w_in"], (D_pad, H_pad)) for p in all_params], axis=1
    ).astype(md)

    # output_layer weights as lane rows; stay f32 (they feed a VPU FMA).
    w_out_all = jnp.concatenate(
        [_pad_to(p["w_out"].T, (1, H_pad)) for p in all_params], axis=0
    ).astype(jnp.float32)

    # All output biases collapse into one scalar added once in the epilogue.
    b_out_sum = jnp.sum(
        jnp.stack([p["b_out"].reshape(()) for p in all_params])
    ).reshape(1).astype(jnp.float32)

    inputs = [x_p, w_in_all, w_out_all, b_out_sum]
    in_specs = [vmem, vmem, vmem, smem]

    flops = 2 * B * D_pad * num_nets * H_pad
    for p, lvl in zip(all_params, lvls):
        n_steps = 2 ** lvl
        n_hid = n_steps - 1
        if n_hid > 0:
            # TODO(synk): when the padded w_hid stack exceeds ~24-32 MiB (v7x
            # has 64 MiB VMEM/TC), switch this input to
            # pl.BlockSpec(memory_space=pl.ANY) and double-buffer one
            # (H_pad,H_pad) slab per hidden layer via pltpu.make_async_copy.
            inputs.append(_pad_to(p["w_hid"], (n_hid, H_pad, H_pad)).astype(md))
            in_specs.append(vmem)
        inputs.append(_pad_to(p["gamma"], (n_steps, H_pad))); in_specs.append(vmem)
        inputs.append(_pad_to(p["beta"], (n_steps, H_pad))); in_specs.append(vmem)
        flops += 2 * B * H_pad * H_pad * n_hid + 2 * B * H_pad

    # Ping-pong skip scratch (producer writes one half, consumer reads other).
    max_skips = max(1, 2 ** lvls[0] // 2 - 1)
    scratch_shapes = [pltpu.VMEM((2 * max_skips, B, H_pad), jnp.float32)]

    # Generation-aware VMEM budget: grid-less kernel => no cross-iteration
    # double buffering, so request actual residency + activations + headroom.
    in_bytes = sum(int(a.size) * a.dtype.itemsize for a in inputs)
    scratch_bytes = 2 * max_skips * B * H_pad * 4
    act_bytes = (num_nets + 4) * B * H_pad * 4
    try:
        vmem_cap = int(pltpu.get_tpu_info().vmem_capacity_bytes)
    except Exception:  # interpret mode / older runtime
        vmem_cap = 128 << 20
    vmem_limit = int(min(max(in_bytes + scratch_bytes + act_bytes + (2 << 20),
                             8 << 20),
                         (vmem_cap * 3) // 4))

    cost = pl.CostEstimate(
        flops=int(flops),
        transcendentals=int(sum(2 ** lvl for lvl in lvls) * H_pad),
        bytes_accessed=int(in_bytes + B * 4),
    )

    kernel = make_fused_kernel(lvls, B, H_pad, max_skips, md)
    out = pl.pallas_call(
        kernel,
        out_shape=jax.ShapeDtypeStruct((B, 1), jnp.float32),
        in_specs=in_specs,
        out_specs=vmem,
        scratch_shapes=scratch_shapes,
        compiler_params=pltpu.CompilerParams(vmem_limit_bytes=vmem_limit),
        cost_estimate=cost,
    )(*inputs)
    return out


# ---------------------------------------------------------------------------
# Deterministic parameter init (shapes follow the PyTorch __init__).
# ---------------------------------------------------------------------------
def init_subnet_params(key, dim_in, q, lvl):
    H = dim_in * q
    n_steps = 2 ** lvl
    n_hid = n_steps - 1
    bound = dim_in ** (-0.5)
    k0, k1, k2, k3 = jax.random.split(key, 4)
    params = {
        "w_in": jax.random.uniform(k0, (dim_in, H), jnp.float32, -bound, bound),
        "gamma": jnp.ones((n_steps, H), jnp.float32),
        "beta": jnp.zeros((n_steps, H), jnp.float32),
        "w_out": jax.random.uniform(k2, (H, 1), jnp.float32, -bound, bound),
        "b_out": jax.random.uniform(k3, (1, 1), jnp.float32,
                                    -H ** (-0.5), H ** (-0.5)),
    }
    if n_hid > 0:
        params["w_hid"] = jax.random.uniform(k1, (n_hid, H, H), jnp.float32,
                                             -bound, bound)
    return params


def init_multilevel_params(key, dim_in, q, level):
    lvls = [level - 1] + list(range(level - 2, -1, -1))
    keys = jax.random.split(key, len(lvls))
    return [init_subnet_params(k, dim_in, q, lvl) for k, lvl in zip(keys, lvls)]


# ---------------------------------------------------------------------------
# Pure-JAX reference (mirrors the PyTorch forward) for verification.
# ---------------------------------------------------------------------------
def _subnet_ref(params, x, skip_in, lvl, add_skip, md):
    def dot(a, b):
        return jnp.dot(a.astype(md), b.astype(md),
                       preferred_element_type=jnp.float32)

    n_steps = 2 ** lvl
    stack = dot(x, params["w_in"])
    skips = []
    for i in range(1, n_steps):
        mean = jnp.mean(stack, axis=0, keepdims=True)
        var = jnp.mean((stack - mean) ** 2, axis=0, keepdims=True)
        stack = (stack - mean) / jnp.sqrt(var + EPS)
        stack = stack * params["gamma"][i - 1] + params["beta"][i - 1]
        stack = jnp.maximum(stack, 0.0)
        stack = dot(stack, params["w_hid"][i - 1])
        if i % 2 == 0:
            skips.append(stack)
        if add_skip:
            stack = stack + skip_in[i - 1]
    mean = jnp.mean(stack, axis=0, keepdims=True)
    var = jnp.mean((stack - mean) ** 2, axis=0, keepdims=True)
    stack = (stack - mean) / jnp.sqrt(var + EPS)
    stack = stack * params["gamma"][-1] + params["beta"][-1]
    stack = jnp.maximum(stack, 0.0)
    out = stack @ params["w_out"] + params["b_out"]
    return out, skips


def multilevel_ref(all_params, x, level, matmul_dtype=jnp.float32):
    out, skip = _subnet_ref(all_params[0], x, None, level - 1, False, matmul_dtype)
    output = out
    for idx, lvl in enumerate(range(level - 2, -1, -1)):
        term, skip = _subnet_ref(all_params[idx + 1], x, skip, lvl, True,
                                 matmul_dtype)
        output = output + term
    return output


if __name__ == "__main__":
    # Small shapes consistent with the module: x is [batch, dim_in].
    B, DIM_IN, Q, LEVEL = 8, 4, 8, 3   # hidden width H = dim_in*q = 32 (-> 128 lanes)

    key = jax.random.PRNGKey(0)
    k_params, k_x = jax.random.split(key)
    all_params = init_multilevel_params(k_params, DIM_IN, Q, LEVEL)
    x = jax.random.normal(k_x, (B, DIM_IN), jnp.float32)

    # f32 matmul path: strict parity with PyTorch semantics.
    out_f32 = jax.block_until_ready(
        multilevel_forward(all_params, x, LEVEL, matmul_dtype=jnp.float32))
    ref_f32 = multilevel_ref(all_params, x, LEVEL)
    assert out_f32.shape == (B, 1)
    assert jnp.allclose(out_f32, ref_f32, atol=1e-3, rtol=1e-3), (out_f32, ref_f32)

    # bf16 matmul path (default): MXU-native on v5e/v6e/v7x, BN math stays f32.
    out_bf16 = jax.block_until_ready(multilevel_forward(all_params, x, LEVEL))
    ref_bf16 = multilevel_ref(all_params, x, LEVEL, matmul_dtype=jnp.bfloat16)
    assert jnp.allclose(out_bf16, ref_bf16, atol=1e-2, rtol=1e-2), (out_bf16, ref_bf16)

    print("KERNEL_OK")
</pallas_src>

<mosaic_0001>
module attributes {stable_mosaic.version = 11 : i64} {
  func.func @kernel(%arg0: memref<8x128xf32, #tpu.memory_space<vmem>>, %arg1: memref<128x384xf32, #tpu.memory_space<vmem>>, %arg2: memref<3x128xf32, #tpu.memory_space<vmem>>, %arg3: memref<1xf32, #tpu.memory_space<smem>>, %arg4: memref<3x128x128xf32, #tpu.memory_space<vmem>>, %arg5: memref<4x128xf32, #tpu.memory_space<vmem>>, %arg6: memref<4x128xf32, #tpu.memory_space<vmem>>, %arg7: memref<1x128x128xf32, #tpu.memory_space<vmem>>, %arg8: memref<2x128xf32, #tpu.memory_space<vmem>>, %arg9: memref<2x128xf32, #tpu.memory_space<vmem>>, %arg10: memref<1x128xf32, #tpu.memory_space<vmem>>, %arg11: memref<1x128xf32, #tpu.memory_space<vmem>>, %arg12: memref<8x1xf32, #tpu.memory_space<vmem>>, %arg13: memref<2x8x128xf32, #tpu.memory_space<vmem>>) attributes {dimension_semantics = [], scalar_prefetch = 0 : i64, scratch_operands = 1 : i64, tpu.core_type = #tpu.core_type<tc>} {
    %c0 = arith.constant 0 : index
    %c0_0 = arith.constant 0 : index
    %0 = vector.load %arg0[%c0, %c0_0] : memref<8x128xf32, #tpu.memory_space<vmem>>, vector<8x128xf32>
    %c0_1 = arith.constant 0 : index
    %c0_2 = arith.constant 0 : index
    %1 = vector.load %arg1[%c0_1, %c0_2] : memref<128x384xf32, #tpu.memory_space<vmem>>, vector<128x384xf32>
    %cst = arith.constant dense<0.000000e+00> : vector<8x384xf32>
    %2 = tpu.matmul %0, %1, %cst {dimension_numbers = #tpu.dot_dimension_numbers<[1], [0], [0], [1], [0, 0, 1, 1], [], []>} : vector<8x128xf32>, vector<128x384xf32>, vector<8x384xf32> -> vector<8x384xf32>
    %cst_3 = arith.constant 0.000000e+00 : f32
    %3 = vector.broadcast %cst_3 : f32 to vector<8x128xf32>
    %4 = vector.extract_strided_slice %2 {offsets = [0, 0], sizes = [8, 128], strides = [1, 1]} : vector<8x384xf32> to vector<8x128xf32>
    %c0_4 = arith.constant 0 : index
    %c0_5 = arith.constant 0 : index
    %5 = vector.load %arg5[%c0_4, %c0_5] : memref<4x128xf32, #tpu.memory_space<vmem>>, vector<1x128xf32>
    %c0_6 = arith.constant 0 : index
    %c0_7 = arith.constant 0 : index
    %6 = vector.load %arg6[%c0_6, %c0_7] : memref<4x128xf32, #tpu.memory_space<vmem>>, vector<1x128xf32>
    %7 = vector.extract_strided_slice %4 {offsets = [0, 0], sizes = [1, 128], strides = [1, 1]} : vector<8x128xf32> to vector<1x128xf32>
    %8 = vector.broadcast %7 : vector<1x128xf32> to vector<8x128xf32>
    %9 = arith.subf %4, %8 : vector<8x128xf32>
    %cst_8 = arith.constant dense<0.000000e+00> : vector<128xf32>
    %10 = vector.multi_reduction <add>, %9, %cst_8 [0] : vector<8x128xf32> to vector<128xf32>
    %11 = vector.shape_cast %10 : vector<128xf32> to vector<1x128xf32>
    %12 = arith.mulf %9, %9 : vector<8x128xf32>
    %cst_9 = arith.constant dense<0.000000e+00> : vector<128xf32>
    %13 = vector.multi_reduction <add>, %12, %cst_9 [0] : vector<8x128xf32> to vector<128xf32>
    %14 = vector.shape_cast %13 : vector<128xf32> to vector<1x128xf32>
    %cst_10 = arith.constant 1.250000e-01 : f32
    %15 = vector.broadcast %cst_10 : f32 to vector<1x128xf32>
    %16 = arith.mulf %11, %15 : vector<1x128xf32>
    %cst_11 = arith.constant 1.250000e-01 : f32
    %17 = vector.broadcast %cst_11 : f32 to vector<1x128xf32>
    %18 = arith.mulf %14, %17 : vector<1x128xf32>
    %19 = arith.mulf %16, %16 : vector<1x128xf32>
    %20 = arith.subf %18, %19 : vector<1x128xf32>
    %cst_12 = arith.constant 0.000000e+00 : f32
    %21 = vector.broadcast %cst_12 : f32 to vector<1x128xf32>
    %22 = arith.maximumf %20, %21 : vector<1x128xf32>
    %23 = vector.broadcast %16 : vector<1x128xf32> to vector<8x128xf32>
    %24 = arith.subf %9, %23 : vector<8x128xf32>
    %cst_13 = arith.constant 9.99999993E-9 : f32
    %25 = vector.broadcast %cst_13 : f32 to vector<1x128xf32>
    %26 = arith.addf %22, %25 : vector<1x128xf32>
    %27 = math.rsqrt %26 : vector<1x128xf32>
    %28 = vector.broadcast %27 : vector<1x128xf32> to vector<8x128xf32>
    %29 = arith.mulf %24, %28 : vector<8x128xf32>
    %30 = vector.broadcast %5 : vector<1x128xf32> to vector<8x128xf32>
    %31 = arith.mulf %29, %30 : vector<8x128xf32>
    %32 = vector.broadcast %6 : vector<1x128xf32> to vector<8x128xf32>
    %33 = arith.addf %31, %32 : vector<8x128xf32>
    %cst_14 = arith.constant 0.000000e+00 : f32
    %34 = vector.broadcast %cst_14 : f32 to vector<8x128xf32>
    %35 = arith.maximumf %33, %34 : vector<8x128xf32>
    %c0_15 = arith.constant 0 : index
    %c0_16 = arith.constant 0 : index
    %c0_17 = arith.constant 0 : index
    %36 = vector.load %arg4[%c0_15, %c0_16, %c0_17] : memref<3x128x128xf32, #tpu.memory_space<vmem>>, vector<1x128x128xf32>
    %37 = vector.shape_cast %36 : vector<1x128x128xf32> to vector<128x128xf32>
    %cst_18 = arith.constant dense<0.000000e+00> : vector<8x128xf32>
    %38 = tpu.matmul %35, %37, %cst_18 {dimension_numbers = #tpu.dot_dimension_numbers<[1], [0], [0], [1], [0, 0, 1, 1], [], []>} : vector<8x128xf32>, vector<128x128xf32>, vector<8x128xf32> -> vector<8x128xf32>
    %c1 = arith.constant 1 : index
    %c0_19 = arith.constant 0 : index
    %39 = vector.load %arg5[%c1, %c0_19] : memref<4x128xf32, #tpu.memory_space<vmem>>, vector<1x128xf32>
    %c1_20 = arith.constant 1 : index
    %c0_21 = arith.constant 0 : index
    %40 = vector.load %arg6[%c1_20, %c0_21] : memref<4x128xf32, #tpu.memory_space<vmem>>, vector<1x128xf32>
    %41 = vector.extract_strided_slice %38 {offsets = [0, 0], sizes = [1, 128], strides = [1, 1]} : vector<8x128xf32> to vector<1x128xf32>
    %42 = vector.broadcast %41 : vector<1x128xf32> to vector<8x128xf32>
    %43 = arith.subf %38, %42 : vector<8x128xf32>
    %cst_22 = arith.constant dense<0.000000e+00> : vector<128xf32>
    %44 = vector.multi_reduction <add>, %43, %cst_22 [0] : vector<8x128xf32> to vector<128xf32>
    %45 = vector.shape_cast %44 : vector<128xf32> to vector<1x128xf32>
    %46 = arith.mulf %43, %43 : vector<8x128xf32>
    %cst_23 = arith.constant dense<0.000000e+00> : vector<128xf32>
    %47 = vector.multi_reduction <add>, %46, %cst_23 [0] : vector<8x128xf32> to vector<128xf32>
    %48 = vector.shape_cast %47 : vector<128xf32> to vector<1x128xf32>
    %cst_24 = arith.constant 1.250000e-01 : f32
    %49 = vector.broadcast %cst_24 : f32 to vector<1x128xf32>
    %50 = arith.mulf %45, %49 : vector<1x128xf32>
    %cst_25 = arith.constant 1.250000e-01 : f32
    %51 = vector.broadcast %cst_25 : f32 to vector<1x128xf32>
    %52 = arith.mulf %48, %51 : vector<1x128xf32>
    %53 = arith.mulf %50, %50 : vector<1x128xf32>
    %54 = arith.subf %52, %53 : vector<1x128xf32>
    %cst_26 = arith.constant 0.000000e+00 : f32
    %55 = vector.broadcast %cst_26 : f32 to vector<1x128xf32>
    %56 = arith.maximumf %54, %55 : vector<1x128xf32>
    %57 = vector.broadcast %50 : vector<1x128xf32> to vector<8x128xf32>
    %58 = arith.subf %43, %57 : vector<8x128xf32>
    %cst_27 = arith.constant 9.99999993E-9 : f32
    %59 = vector.broadcast %cst_27 : f32 to vector<1x128xf32>
    %60 = arith.addf %56, %59 : vector<1x128xf32>
    %61 = math.rsqrt %60 : vector<1x128xf32>
    %62 = vector.broadcast %61 : vector<1x128xf32> to vector<8x128xf32>
    %63 = arith.mulf %58, %62 : vector<8x128xf32>
    %64 = vector.broadcast %39 : vector<1x128xf32> to vector<8x128xf32>
    %65 = arith.mulf %63, %64 : vector<8x128xf32>
    %66 = vector.broadcast %40 : vector<1x128xf32> to vector<8x128xf32>
    %67 = arith.addf %65, %66 : vector<8x128xf32>
    %cst_28 = arith.constant 0.000000e+00 : f32
    %68 = vector.broadcast %cst_28 : f32 to vector<8x128xf32>
    %69 = arith.maximumf %67, %68 : vector<8x128xf32>
    %c1_29 = arith.constant 1 : index
    %c0_30 = arith.constant 0 : index
    %c0_31 = arith.constant 0 : index
    %70 = vector.load %arg4[%c1_29, %c0_30, %c0_31] : memref<3x128x128xf32, #tpu.memory_space<vmem>>, vector<1x128x128xf32>
    %71 = vector.shape_cast %70 : vector<1x128x128xf32> to vector<128x128xf32>
    %cst_32 = arith.constant dense<0.000000e+00> : vector<8x128xf32>
    %72 = tpu.matmul %69, %71, %cst_32 {dimension_numbers = #tpu.dot_dimension_numbers<[1], [0], [0], [1], [0, 0, 1, 1], [], []>} : vector<8x128xf32>, vector<128x128xf32>, vector<8x128xf32> -> vector<8x128xf32>
    %c0_33 = arith.constant 0 : index
    %c0_34 = arith.constant 0 : index
    %c0_35 = arith.constant 0 : index
    %73 = vector.load %arg13[%c0_33, %c0_34, %c0_35] : memref<2x8x128xf32, #tpu.memory_space<vmem>>, vector<1x8x128xf32>
    %74 = vector.shape_cast %73 : vector<1x8x128xf32> to vector<8x128xf32>
    %75 = vector.shape_cast %72 : vector<8x128xf32> to vector<1x8x128xf32>
    tpu.vector_store %arg13[%c0_33, %c0_34, %c0_35], %75 {strides = array<i32>} : memref<2x8x128xf32, #tpu.memory_space<vmem>>, vector<1x8x128xf32>,
    %c2 = arith.constant 2 : index
    %c0_36 = arith.constant 0 : index
    %76 = vector.load %arg5[%c2, %c0_36] : memref<4x128xf32, #tpu.memory_space<vmem>>, vector<1x128xf32>
    %c2_37 = arith.constant 2 : index
    %c0_38 = arith.constant 0 : index
    %77 = vector.load %arg6[%c2_37, %c0_38] : memref<4x128xf32, #tpu.memory_space<vmem>>, vector<1x128xf32>
    %78 = vector.extract_strided_slice %72 {offsets = [0, 0], sizes = [1, 128], strides = [1, 1]} : vector<8x128xf32> to vector<1x128xf32>
    %79 = vector.broadcast %78 : vector<1x128xf32> to vector<8x128xf32>
    %80 = arith.subf %72, %79 : vector<8x128xf32>
    %cst_39 = arith.constant dense<0.000000e+00> : vector<128xf32>
    %81 = vector.multi_reduction <add>, %80, %cst_39 [0] : vector<8x128xf32> to vector<128xf32>
    %82 = vector.shape_cast %81 : vector<128xf32> to vector<1x128xf32>
    %83 = arith.mulf %80, %80 : vector<8x128xf32>
    %cst_40 = arith.constant dense<0.000000e+00> : vector<128xf32>
    %84 = vector.multi_reduction <add>, %83, %cst_40 [0] : vector<8x128xf32> to vector<128xf32>
    %85 = vector.shape_cast %84 : vector<128xf32> to vector<1x128xf32>
    %cst_41 = arith.constant 1.250000e-01 : f32
    %86 = vector.broadcast %cst_41 : f32 to vector<1x128xf32>
    %87 = arith.mulf %82, %86 : vector<1x128xf32>
    %cst_42 = arith.constant 1.250000e-01 : f32
    %88 = vector.broadcast %cst_42 : f32 to vector<1x128xf32>
    %89 = arith.mulf %85, %88 : vector<1x128xf32>
    %90 = arith.mulf %87, %87 : vector<1x128xf32>
    %91 = arith.subf %89, %90 : vector<1x128xf32>
    %cst_43 = arith.constant 0.000000e+00 : f32
    %92 = vector.broadcast %cst_43 : f32 to vector<1x128xf32>
    %93 = arith.maximumf %91, %92 : vector<1x128xf32>
    %94 = vector.broadcast %87 : vector<1x128xf32> to vector<8x128xf32>
    %95 = arith.subf %80, %94 : vector<8x128xf32>
    %cst_44 = arith.constant 9.99999993E-9 : f32
    %96 = vector.broadcast %cst_44 : f32 to vector<1x128xf32>
    %97 = arith.addf %93, %96 : vector<1x128xf32>
    %98 = math.rsqrt %97 : vector<1x128xf32>
    %99 = vector.broadcast %98 : vector<1x128xf32> to vector<8x128xf32>
    %100 = arith.mulf %95, %99 : vector<8x128xf32>
    %101 = vector.broadcast %76 : vector<1x128xf32> to vector<8x128xf32>
    %102 = arith.mulf %100, %101 : vector<8x128xf32>
    %103 = vector.broadcast %77 : vector<1x128xf32> to vector<8x128xf32>
    %104 = arith.addf %102, %103 : vector<8x128xf32>
    %cst_45 = arith.constant 0.000000e+00 : f32
    %105 = vector.broadcast %cst_45 : f32 to vector<8x128xf32>
    %106 = arith.maximumf %104, %105 : vector<8x128xf32>
    %c2_46 = arith.constant 2 : index
    %c0_47 = arith.constant 0 : index
    %c0_48 = arith.constant 0 : index
    %107 = vector.load %arg4[%c2_46, %c0_47, %c0_48] : memref<3x128x128xf32, #tpu.memory_space<vmem>>, vector<1x128x128xf32>
    %108 = vector.shape_cast %107 : vector<1x128x128xf32> to vector<128x128xf32>
    %cst_49 = arith.constant dense<0.000000e+00> : vector<8x128xf32>
    %109 = tpu.matmul %106, %108, %cst_49 {dimension_numbers = #tpu.dot_dimension_numbers<[1], [0], [0], [1], [0, 0, 1, 1], [], []>} : vector<8x128xf32>, vector<128x128xf32>, vector<8x128xf32> -> vector<8x128xf32>
    %c3 = arith.constant 3 : index
    %c0_50 = arith.constant 0 : index
    %110 = vector.load %arg5[%c3, %c0_50] : memref<4x128xf32, #tpu.memory_space<vmem>>, vector<1x128xf32>
    %c3_51 = arith.constant 3 : index
    %c0_52 = arith.constant 0 : index
    %111 = vector.load %arg6[%c3_51, %c0_52] : memref<4x128xf32, #tpu.memory_space<vmem>>, vector<1x128xf32>
    %112 = vector.extract_strided_slice %109 {offsets = [0, 0], sizes = [1, 128], strides = [1, 1]} : vector<8x128xf32> to vector<1x128xf32>
    %113 = vector.broadcast %112 : vector<1x128xf32> to vector<8x128xf32>
    %114 = arith.subf %109, %113 : vector<8x128xf32>
    %cst_53 = arith.constant dense<0.000000e+00> : vector<128xf32>
    %115 = vector.multi_reduction <add>, %114, %cst_53 [0] : vector<8x128xf32> to vector<128xf32>
    %116 = vector.shape_cast %115 : vector<128xf32> to vector<1x128xf32>
    %117 = arith.mulf %114, %114 : vector<8x128xf32>
    %cst_54 = arith.constant dense<0.000000e+00> : vector<128xf32>
    %118 = vector.multi_reduction <add>, %117, %cst_54 [0] : vector<8x128xf32> to vector<128xf32>
    %119 = vector.shape_cast %118 : vector<128xf32> to vector<1x128xf32>
    %cst_55 = arith.constant 1.250000e-01 : f32
    %120 = vector.broadcast %cst_55 : f32 to vector<1x128xf32>
    %121 = arith.mulf %116, %120 : vector<1x128xf32>
    %cst_56 = arith.constant 1.250000e-01 : f32
    %122 = vector.broadcast %cst_56 : f32 to vector<1x128xf32>
    %123 = arith.mulf %119, %122 : vector<1x128xf32>
    %124 = arith.mulf %121, %121 : vector<1x128xf32>
    %125 = arith.subf %123, %124 : vector<1x128xf32>
    %cst_57 = arith.constant 0.000000e+00 : f32
    %126 = vector.broadcast %cst_57 : f32 to vector<1x128xf32>
    %127 = arith.maximumf %125, %126 : vector<1x128xf32>
    %128 = vector.broadcast %121 : vector<1x128xf32> to vector<8x128xf32>
    %129 = arith.subf %114, %128 : vector<8x128xf32>
    %cst_58 = arith.constant 9.99999993E-9 : f32
    %130 = vector.broadcast %cst_58 : f32 to vector<1x128xf32>
    %131 = arith.addf %127, %130 : vector<1x128xf32>
    %132 = math.rsqrt %131 : vector<1x128xf32>
    %133 = vector.broadcast %132 : vector<1x128xf32> to vector<8x128xf32>
    %134 = arith.mulf %129, %133 : vector<8x128xf32>
    %135 = vector.broadcast %110 : vector<1x128xf32> to vector<8x128xf32>
    %136 = arith.mulf %134, %135 : vector<8x128xf32>
    %137 = vector.broadcast %111 : vector<1x128xf32> to vector<8x128xf32>
    %138 = arith.addf %136, %137 : vector<8x128xf32>
    %cst_59 = arith.constant 0.000000e+00 : f32
    %139 = vector.broadcast %cst_59 : f32 to vector<8x128xf32>
    %140 = arith.maximumf %138, %139 : vector<8x128xf32>
    %c0_60 = arith.constant 0 : index
    %c0_61 = arith.constant 0 : index
    %141 = vector.load %arg2[%c0_60, %c0_61] : memref<3x128xf32, #tpu.memory_space<vmem>>, vector<1x128xf32>
    %142 = vector.broadcast %141 : vector<1x128xf32> to vector<8x128xf32>
    %143 = arith.mulf %140, %142 : vector<8x128xf32>
    %144 = arith.addf %3, %143 : vector<8x128xf32>
    %145 = vector.extract_strided_slice %2 {offsets = [0, 128], sizes = [8, 128], strides = [1, 1]} : vector<8x384xf32> to vector<8x128xf32>
    %c0_62 = arith.constant 0 : index
    %c0_63 = arith.constant 0 : index
    %146 = vector.load %arg8[%c0_62, %c0_63] : memref<2x128xf32, #tpu.memory_space<vmem>>, vector<1x128xf32>
    %c0_64 = arith.constant 0 : index
    %c0_65 = arith.constant 0 : index
    %147 = vector.load %arg9[%c0_64, %c0_65] : memref<2x128xf32, #tpu.memory_space<vmem>>, vector<1x128xf32>
    %148 = vector.extract_strided_slice %145 {offsets = [0, 0], sizes = [1, 128], strides = [1, 1]} : vector<8x128xf32> to vector<1x128xf32>
    %149 = vector.broadcast %148 : vector<1x128xf32> to vector<8x128xf32>
    %150 = arith.subf %145, %149 : vector<8x128xf32>
    %cst_66 = arith.constant dense<0.000000e+00> : vector<128xf32>
    %151 = vector.multi_reduction <add>, %150, %cst_66 [0] : vector<8x128xf32> to vector<128xf32>
    %152 = vector.shape_cast %151 : vector<128xf32> to vector<1x128xf32>
    %153 = arith.mulf %150, %150 : vector<8x128xf32>
    %cst_67 = arith.constant dense<0.000000e+00> : vector<128xf32>
    %154 = vector.multi_reduction <add>, %153, %cst_67 [0] : vector<8x128xf32> to vector<128xf32>
    %155 = vector.shape_cast %154 : vector<128xf32> to vector<1x128xf32>
    %cst_68 = arith.constant 1.250000e-01 : f32
    %156 = vector.broadcast %cst_68 : f32 to vector<1x128xf32>
    %157 = arith.mulf %152, %156 : vector<1x128xf32>
    %cst_69 = arith.constant 1.250000e-01 : f32
    %158 = vector.broadcast %cst_69 : f32 to vector<1x128xf32>
    %159 = arith.mulf %155, %158 : vector<1x128xf32>
    %160 = arith.mulf %157, %157 : vector<1x128xf32>
    %161 = arith.subf %159, %160 : vector<1x128xf32>
    %cst_70 = arith.constant 0.000000e+00 : f32
    %162 = vector.broadcast %cst_70 : f32 to vector<1x128xf32>
    %163 = arith.maximumf %161, %162 : vector<1x128xf32>
    %164 = vector.broadcast %157 : vector<1x128xf32> to vector<8x128xf32>
    %165 = arith.subf %150, %164 : vector<8x128xf32>
    %cst_71 = arith.constant 9.99999993E-9 : f32
    %166 = vector.broadcast %cst_71 : f32 to vector<1x128xf32>
    %167 = arith.addf %163, %166 : vector<1x128xf32>
    %168 = math.rsqrt %167 : vector<1x128xf32>
    %169 = vector.broadcast %168 : vector<1x128xf32> to vector<8x128xf32>
    %170 = arith.mulf %165, %169 : vector<8x128xf32>
    %171 = vector.broadcast %146 : vector<1x128xf32> to vector<8x128xf32>
    %172 = arith.mulf %170, %171 : vector<8x128xf32>
    %173 = vector.broadcast %147 : vector<1x128xf32> to vector<8x128xf32>
    %174 = arith.addf %172, %173 : vector<8x128xf32>
    %cst_72 = arith.constant 0.000000e+00 : f32
    %175 = vector.broadcast %cst_72 : f32 to vector<8x128xf32>
    %176 = arith.maximumf %174, %175 : vector<8x128xf32>
    %c0_73 = arith.constant 0 : index
    %c0_74 = arith.constant 0 : index
    %c0_75 = arith.constant 0 : index
    %177 = vector.load %arg7[%c0_73, %c0_74, %c0_75] : memref<1x128x128xf32, #tpu.memory_space<vmem>>, vector<1x128x128xf32>
    %178 = vector.shape_cast %177 : vector<1x128x128xf32> to vector<128x128xf32>
    %cst_76 = arith.constant dense<0.000000e+00> : vector<8x128xf32>
    %179 = tpu.matmul %176, %178, %cst_76 {dimension_numbers = #tpu.dot_dimension_numbers<[1], [0], [0], [1], [0, 0, 1, 1], [], []>} : vector<8x128xf32>, vector<128x128xf32>, vector<8x128xf32> -> vector<8x128xf32>
    %c0_77 = arith.constant 0 : index
    %c0_78 = arith.constant 0 : index
    %c0_79 = arith.constant 0 : index
    %180 = vector.load %arg13[%c0_77, %c0_78, %c0_79] : memref<2x8x128xf32, #tpu.memory_space<vmem>>, vector<1x8x128xf32>
    %181 = vector.shape_cast %180 : vector<1x8x128xf32> to vector<8x128xf32>
    %182 = arith.addf %179, %181 : vector<8x128xf32>
    %c1_80 = arith.constant 1 : index
    %c0_81 = arith.constant 0 : index
    %183 = vector.load %arg8[%c1_80, %c0_81] : memref<2x128xf32, #tpu.memory_space<vmem>>, vector<1x128xf32>
    %c1_82 = arith.constant 1 : index
    %c0_83 = arith.constant 0 : index
    %184 = vector.load %arg9[%c1_82, %c0_83] : memref<2x128xf32, #tpu.memory_space<vmem>>, vector<1x128xf32>
    %185 = vector.extract_strided_slice %182 {offsets = [0, 0], sizes = [1, 128], strides = [1, 1]} : vector<8x128xf32> to vector<1x128xf32>
    %186 = vector.broadcast %185 : vector<1x128xf32> to vector<8x128xf32>
    %187 = arith.subf %182, %186 : vector<8x128xf32>
    %cst_84 = arith.constant dense<0.000000e+00> : vector<128xf32>
    %188 = vector.multi_reduction <add>, %187, %cst_84 [0] : vector<8x128xf32> to vector<128xf32>
    %189 = vector.shape_cast %188 : vector<128xf32> to vector<1x128xf32>
    %190 = arith.mulf %187, %187 : vector<8x128xf32>
    %cst_85 = arith.constant dense<0.000000e+00> : vector<128xf32>
    %191 = vector.multi_reduction <add>, %190, %cst_85 [0] : vector<8x128xf32> to vector<128xf32>
    %192 = vector.shape_cast %191 : vector<128xf32> to vector<1x128xf32>
    %cst_86 = arith.constant 1.250000e-01 : f32
    %193 = vector.broadcast %cst_86 : f32 to vector<1x128xf32>
    %194 = arith.mulf %189, %193 : vector<1x128xf32>
    %cst_87 = arith.constant 1.250000e-01 : f32
    %195 = vector.broadcast %cst_87 : f32 to vector<1x128xf32>
    %196 = arith.mulf %192, %195 : vector<1x128xf32>
    %197 = arith.mulf %194, %194 : vector<1x128xf32>
    %198 = arith.subf %196, %197 : vector<1x128xf32>
    %cst_88 = arith.constant 0.000000e+00 : f32
    %199 = vector.broadcast %cst_88 : f32 to vector<1x128xf32>
    %200 = arith.maximumf %198, %199 : vector<1x128xf32>
    %201 = vector.broadcast %194 : vector<1x128xf32> to vector<8x128xf32>
    %202 = arith.subf %187, %201 : vector<8x128xf32>
    %cst_89 = arith.constant 9.99999993E-9 : f32
    %203 = vector.broadcast %cst_89 : f32 to vector<1x128xf32>
    %204 = arith.addf %200, %203 : vector<1x128xf32>
    %205 = math.rsqrt %204 : vector<1x128xf32>
    %206 = vector.broadcast %205 : vector<1x128xf32> to vector<8x128xf32>
    %207 = arith.mulf %202, %206 : vector<8x128xf32>
    %208 = vector.broadcast %183 : vector<1x128xf32> to vector<8x128xf32>
    %209 = arith.mulf %207, %208 : vector<8x128xf32>
    %210 = vector.broadcast %184 : vector<1x128xf32> to vector<8x128xf32>
    %211 = arith.addf %209, %210 : vector<8x128xf32>
    %cst_90 = arith.constant 0.000000e+00 : f32
    %212 = vector.broadcast %cst_90 : f32 to vector<8x128xf32>
    %213 = arith.maximumf %211, %212 : vector<8x128xf32>
    %c1_91 = arith.constant 1 : index
    %c0_92 = arith.constant 0 : index
    %214 = vector.load %arg2[%c1_91, %c0_92] : memref<3x128xf32, #tpu.memory_space<vmem>>, vector<1x128xf32>
    %215 = vector.broadcast %214 : vector<1x128xf32> to vector<8x128xf32>
    %216 = arith.mulf %213, %215 : vector<8x128xf32>
    %217 = arith.addf %144, %216 : vector<8x128xf32>
    %218 = vector.extract_strided_slice %2 {offsets = [0, 256], sizes = [8, 128], strides = [1, 1]} : vector<8x384xf32> to vector<8x128xf32>
    %c0_93 = arith.constant 0 : index
    %c0_94 = arith.constant 0 : index
    %219 = vector.load %arg10[%c0_93, %c0_94] : memref<1x128xf32, #tpu.memory_space<vmem>>, vector<1x128xf32>
    %c0_95 = arith.constant 0 : index
    %c0_96 = arith.constant 0 : index
    %220 = vector.load %arg11[%c0_95, %c0_96] : memref<1x128xf32, #tpu.memory_space<vmem>>, vector<1x128xf32>
    %221 = vector.extract_strided_slice %218 {offsets = [0, 0], sizes = [1, 128], strides = [1, 1]} : vector<8x128xf32> to vector<1x128xf32>
    %222 = vector.broadcast %221 : vector<1x128xf32> to vector<8x128xf32>
    %223 = arith.subf %218, %222 : vector<8x128xf32>
    %cst_97 = arith.constant dense<0.000000e+00> : vector<128xf32>
    %224 = vector.multi_reduction <add>, %223, %cst_97 [0] : vector<8x128xf32> to vector<128xf32>
    %225 = vector.shape_cast %224 : vector<128xf32> to vector<1x128xf32>
    %226 = arith.mulf %223, %223 : vector<8x128xf32>
    %cst_98 = arith.constant dense<0.000000e+00> : vector<128xf32>
    %227 = vector.multi_reduction <add>, %226, %cst_98 [0] : vector<8x128xf32> to vector<128xf32>
    %228 = vector.shape_cast %227 : vector<128xf32> to vector<1x128xf32>
    %cst_99 = arith.constant 1.250000e-01 : f32
    %229 = vector.broadcast %cst_99 : f32 to vector<1x128xf32>
    %230 = arith.mulf %225, %229 : vector<1x128xf32>
    %cst_100 = arith.constant 1.250000e-01 : f32
    %231 = vector.broadcast %cst_100 : f32 to vector<1x128xf32>
    %232 = arith.mulf %228, %231 : vector<1x128xf32>
    %233 = arith.mulf %230, %230 : vector<1x128xf32>
    %234 = arith.subf %232, %233 : vector<1x128xf32>
    %cst_101 = arith.constant 0.000000e+00 : f32
    %235 = vector.broadcast %cst_101 : f32 to vector<1x128xf32>
    %236 = arith.maximumf %234, %235 : vector<1x128xf32>
    %237 = vector.broadcast %230 : vector<1x128xf32> to vector<8x128xf32>
    %238 = arith.subf %223, %237 : vector<8x128xf32>
    %cst_102 = arith.constant 9.99999993E-9 : f32
    %239 = vector.broadcast %cst_102 : f32 to vector<1x128xf32>
    %240 = arith.addf %236, %239 : vector<1x128xf32>
    %241 = math.rsqrt %240 : vector<1x128xf32>
    %242 = vector.broadcast %241 : vector<1x128xf32> to vector<8x128xf32>
    %243 = arith.mulf %238, %242 : vector<8x128xf32>
    %244 = vector.broadcast %219 : vector<1x128xf32> to vector<8x128xf32>
    %245 = arith.mulf %243, %244 : vector<8x128xf32>
    %246 = vector.broadcast %220 : vector<1x128xf32> to vector<8x128xf32>
    %247 = arith.addf %245, %246 : vector<8x128xf32>
    %cst_103 = arith.constant 0.000000e+00 : f32
    %248 = vector.broadcast %cst_103 : f32 to vector<8x128xf32>
    %249 = arith.maximumf %247, %248 : vector<8x128xf32>
    %c2_104 = arith.constant 2 : index
    %c0_105 = arith.constant 0 : index
    %250 = vector.load %arg2[%c2_104, %c0_105] : memref<3x128xf32, #tpu.memory_space<vmem>>, vector<1x128xf32>
    %251 = vector.broadcast %250 : vector<1x128xf32> to vector<8x128xf32>
    %252 = arith.mulf %249, %251 : vector<8x128xf32>
    %253 = arith.addf %217, %252 : vector<8x128xf32>
    %cst_106 = arith.constant dense<0.000000e+00> : vector<8xf32>
    %254 = vector.multi_reduction <add>, %253, %cst_106 [1] : vector<8x128xf32> to vector<8xf32>
    %255 = vector.shape_cast %254 : vector<8xf32> to vector<8x1xf32>
    %c0_107 = arith.constant 0 : index
    %256 = memref.load %arg3[%c0_107] : memref<1xf32, #tpu.memory_space<smem>>
    %257 = vector.broadcast %256 : f32 to vector<8x1xf32>
    %258 = arith.addf %255, %257 : vector<8x1xf32>
    %c0_108 = arith.constant 0 : index
    %c0_109 = arith.constant 0 : index
    %259 = vector.load %arg12[%c0_108, %c0_109] : memref<8x1xf32, #tpu.memory_space<vmem>>, vector<8x1xf32>
    tpu.vector_store %arg12[%c0_108, %c0_109], %258 {strides = array<i32>} : memref<8x1xf32, #tpu.memory_space<vmem>>, vector<8x1xf32>,
    return
  }
}

</mosaic_0001>

<llo_original>
// kernel: tpu_custom_call.1
$region0: #{tpu_custom_call.1}
  #allocation0 [shape = 'u32[]', space=smem, size = 0x4, offset = 0x4, fixed_abs, tag = 'smem constant byte address 0x4 - core index']
  #allocation1 [shape = 'u32[72,128]{1,0:T(1,128)}', space=vmem, size = 0x9000, scoped, tag = 'internal scratch']
  #allocation2 [shape = 'f32[2,8,128]{2,1,0:T(8,128)}', space=vmem, size = 0x2000, scoped, tag = 'scratch operand']
  #allocation3 [shape = 'f32[1]{0:T(128)S(6)}', space=smem, size = 0x200, scoped, tag = 'scoped memory for tpu_custom_call.1']
  %s0 = inlined_call_operand.hbm [shape: f32[8,128], index: 0, kind: input, shape index: {}]
  %s1 = inlined_call_operand.hbm [shape: f32[128,384], index: 1, kind: input, shape index: {}]
  %s2 = inlined_call_operand.hbm [shape: f32[3,128], index: 2, kind: input, shape index: {}]
  %s3 = inlined_call_operand.<no memory space> [shape: f32[1], index: 3, kind: input, shape index: {}]
  %s4 = inlined_call_operand.hbm [shape: f32[3,128,128], index: 4, kind: input, shape index: {}]
  %s5 = inlined_call_operand.vmem [shape: f32[4,128], index: 5, kind: input, shape index: {}]
  %s6 = inlined_call_operand.hbm [shape: f32[4,128], index: 6, kind: input, shape index: {}]
  %s7 = inlined_call_operand.hbm [shape: f32[1,128,128], index: 7, kind: input, shape index: {}]
  %s8 = inlined_call_operand.vmem [shape: f32[2,128], index: 8, kind: input, shape index: {}]
  %s9 = inlined_call_operand.vmem [shape: f32[2,128], index: 9, kind: input, shape index: {}]
  %s10 = inlined_call_operand.vmem [shape: f32[1,128], index: 10, kind: input, shape index: {}]
  %s11 = inlined_call_operand.vmem [shape: f32[1,128], index: 11, kind: input, shape index: {}]
  %s12 = inlined_call_operand.vmem [shape: f32[8,1], index: 12, kind: output, shape index: {}]
  %s13 = sld [smem:[#allocation0]]
  $region82: #{tpu_custom_call.1} parent=0
    _
  %s15 = ssub.s32 1, %s13
  %s16 = scalar_select 0, %s15, %s13
  %17 = sst [smem:[#allocation3]] %s3
  $region1: #{tpu_custom_call.1} parent=0
    #allocation4 [shape = 'u8[4096]{0}', space=vmem, size = 0x1000, scoped, tag = 'input window, operand 0, single buffered']
    #allocation5 [shape = 's32[1]{0}', space=sflag, size = 0x4, scoped, tag = 'scoped memory for tpu_custom_call.1']
    #allocation6 [shape = 'u8[196608]{0}', space=vmem, size = 0x30000, scoped, tag = 'input window, operand 1, single buffered']
    #allocation7 [shape = 's32[1]{0}', space=sflag, size = 0x4, scoped, tag = 'scoped memory for tpu_custom_call.1']
    #allocation8 [shape = 'u8[2048]{0}', space=vmem, size = 0x800, scoped, tag = 'input window, operand 2, single buffered']
    #allocation9 [shape = 'u8[196608]{0}', space=vmem, size = 0x30000, scoped, tag = 'input window, operand 4, single buffered']
    #allocation10 [shape = 's32[1]{0}', space=sflag, size = 0x4, scoped, tag = 'scoped memory for tpu_custom_call.1']
    #allocation11 [shape = 'u8[2048]{0}', space=vmem, size = 0x800, scoped, tag = 'input window, operand 6, single buffered']
    #allocation12 [shape = 'u8[65536]{0}', space=vmem, size = 0x10000, scoped, tag = 'input window, operand 7, single buffered']
    #allocation13 [shape = 's32[1]{0}', space=sflag, size = 0x4, scoped, tag = 'scoped memory for tpu_custom_call.1']
    %18 = vsyncpa [#allocation5], 0
    %19 = vsyncpa [#allocation7], 0
    %20 = vsyncpa [#allocation10], 0
    %21 = vsyncpa [#allocation13], 0
    // Predicated region
    $region2: #{tpu_custom_call.1} parent=1 // pred_check
      _
    $region3: #{tpu_custom_call.1} parent=1 // pred_check_branch
      %23 = sbr.rel (0) target = $region5
    $region4: #{tpu_custom_call.1} parent=1 // pred_region
      %25 = vsyncadd [#allocation5], 0
      %s27 = sshll.u32 %s0, 4
      %s28 = int_to_ptr.hbm [resolvable:$true] %s27
      %s29 = sshll.u32 [#allocation4], 4
      %s30 = int_to_ptr.vmem [resolvable:$true] %s29
      %32 = dma.hbm_to_vmem [thread:$0]  %s28, 128, %s30, [#allocation5]
    $region5: #{tpu_custom_call.1} parent=1 // pred_fallthru
      _
    // Predicated region
    $region6: #{tpu_custom_call.1} parent=1 // pred_check
      _
    $region7: #{tpu_custom_call.1} parent=1 // pred_check_branch
      %34 = sbr.rel (0) target = $region9
    $region8: #{tpu_custom_call.1} parent=1 // pred_region
      %36 = vsyncadd [#allocation7], 0
      %s37 = sshll.u32 %s1, 4
      %s38 = int_to_ptr.hbm [resolvable:$true] %s37
      %s39 = sshll.u32 [#allocation6], 4
      %s40 = int_to_ptr.vmem [resolvable:$true] %s39
      %45 = dma.hbm_to_vmem [thread:$0]  %s38, 6144, %s40, [#allocation7], 384, 384, 24
    $region9: #{tpu_custom_call.1} parent=1 // pred_fallthru
      _
    // Predicated region
    $region10: #{tpu_custom_call.1} parent=1 // pred_check
      _
    $region11: #{tpu_custom_call.1} parent=1 // pred_check_branch
      %47 = sbr.rel (0) target = $region13
    $region12: #{tpu_custom_call.1} parent=1 // pred_region
      %49 = vsyncadd [#allocation7], 0
      %s51 = sshll.u32 %s2, 4
      %s52 = int_to_ptr.hbm [resolvable:$true] %s51
      %s53 = sshll.u32 [#allocation8], 4
      %s54 = int_to_ptr.vmem [resolvable:$true] %s53
      %56 = dma.hbm_to_vmem [thread:$0]  %s52, 64, %s54, [#allocation7]
    $region13: #{tpu_custom_call.1} parent=1 // pred_fallthru
      _
    // Predicated region
    $region14: #{tpu_custom_call.1} parent=1 // pred_check
      _
    $region15: #{tpu_custom_call.1} parent=1 // pred_check_branch
      %58 = sbr.rel (0) target = $region17
    $region16: #{tpu_custom_call.1} parent=1 // pred_region
      _
    $region17: #{tpu_custom_call.1} parent=1 // pred_fallthru
      _
    // Predicated region
    $region18: #{tpu_custom_call.1} parent=1 // pred_check
      _
    $region19: #{tpu_custom_call.1} parent=1 // pred_check_branch
      %60 = sbr.rel (0) target = $region21
    $region20: #{tpu_custom_call.1} parent=1 // pred_region
      %62 = vsyncadd [#allocation10], 0
      %s63 = sshll.u32 %s4, 4
      %s64 = int_to_ptr.hbm [resolvable:$true] %s63
      %s65 = sshll.u32 [#allocation9], 4
      %s66 = int_to_ptr.vmem [resolvable:$true] %s65
      %71 = dma.hbm_to_vmem [thread:$0]  %s64, 6144, %s66, [#allocation10], 128, 128, 8
    $region21: #{tpu_custom_call.1} parent=1 // pred_fallthru
      _
    // Predicated region
    $region22: #{tpu_custom_call.1} parent=1 // pred_check
      _
    $region23: #{tpu_custom_call.1} parent=1 // pred_check_branch
      %73 = sbr.rel (0) target = $region25
    $region24: #{tpu_custom_call.1} parent=1 // pred_region
      _
    $region25: #{tpu_custom_call.1} parent=1 // pred_fallthru
      _
    // Predicated region
    $region26: #{tpu_custom_call.1} parent=1 // pred_check
      _
    $region27: #{tpu_custom_call.1} parent=1 // pred_check_branch
      %75 = sbr.rel (0) target = $region29
    $region28: #{tpu_custom_call.1} parent=1 // pred_region
      %77 = vsyncadd [#allocation10], 0
      %s79 = sshll.u32 %s6, 4
      %s80 = int_to_ptr.hbm [resolvable:$true] %s79
      %s81 = sshll.u32 [#allocation11], 4
      %s82 = int_to_ptr.vmem [resolvable:$true] %s81
      %84 = dma.hbm_to_vmem [thread:$0]  %s80, 64, %s82, [#allocation10]
    $region29: #{tpu_custom_call.1} parent=1 // pred_fallthru
      _
    // Predicated region
    $region30: #{tpu_custom_call.1} parent=1 // pred_check
      _
    $region31: #{tpu_custom_call.1} parent=1 // pred_check_branch
      %86 = sbr.rel (0) target = $region33
    $region32: #{tpu_custom_call.1} parent=1 // pred_region
      %88 = vsyncadd [#allocation13], 0
      %s89 = sshll.u32 %s7, 4
      %s90 = int_to_ptr.hbm [resolvable:$true] %s89
      %s91 = sshll.u32 [#allocation12], 4
      %s92 = int_to_ptr.vmem [resolvable:$true] %s91
      %97 = dma.hbm_to_vmem [thread:$0]  %s90, 2048, %s92, [#allocation13], 128, 128, 8
    $region33: #{tpu_custom_call.1} parent=1 // pred_fallthru
      _
    // Predicated region
    $region34: #{tpu_custom_call.1} parent=1 // pred_check
      _
    $region35: #{tpu_custom_call.1} parent=1 // pred_check_branch
      %99 = sbr.rel (0) target = $region37
    $region36: #{tpu_custom_call.1} parent=1 // pred_region
      _
    $region37: #{tpu_custom_call.1} parent=1 // pred_fallthru
      _
    // Predicated region
    $region38: #{tpu_custom_call.1} parent=1 // pred_check
      _
    $region39: #{tpu_custom_call.1} parent=1 // pred_check_branch
      %101 = sbr.rel (0) target = $region41
    $region40: #{tpu_custom_call.1} parent=1 // pred_region
      _
    $region41: #{tpu_custom_call.1} parent=1 // pred_fallthru
      _
    // Predicated region
    $region42: #{tpu_custom_call.1} parent=1 // pred_check
      _
    $region43: #{tpu_custom_call.1} parent=1 // pred_check_branch
      %103 = sbr.rel (0) target = $region45
    $region44: #{tpu_custom_call.1} parent=1 // pred_region
      _
    $region45: #{tpu_custom_call.1} parent=1 // pred_fallthru
      _
    // Predicated region
    $region46: #{tpu_custom_call.1} parent=1 // pred_check
      _
    $region47: #{tpu_custom_call.1} parent=1 // pred_check_branch
      %105 = sbr.rel (0) target = $region49
    $region48: #{tpu_custom_call.1} parent=1 // pred_region
      _
    $region49: #{tpu_custom_call.1} parent=1 // pred_fallthru
      _
    // Predicated region
    $region50: #{tpu_custom_call.1} parent=1 // pred_check
      _
    $region51: #{tpu_custom_call.1} parent=1 // pred_check_branch
      %107 = sbr.rel (0) target = $region53
    $region52: #{tpu_custom_call.1} parent=1 // pred_region
      %109 = dma.done [#allocation5], 128
    $region53: #{tpu_custom_call.1} parent=1 // pred_fallthru
      _
    // Predicated region
    $region54: #{tpu_custom_call.1} parent=1 // pred_check
      _
    $region55: #{tpu_custom_call.1} parent=1 // pred_check_branch
      %111 = sbr.rel (0) target = $region57
    $region56: #{tpu_custom_call.1} parent=1 // pred_region
      %113 = dma.done [#allocation7], 6144
    $region57: #{tpu_custom_call.1} parent=1 // pred_fallthru
      _
    // Predicated region
    $region58: #{tpu_custom_call.1} parent=1 // pred_check
      _
    $region59: #{tpu_custom_call.1} parent=1 // pred_check_branch
      %115 = sbr.rel (0) target = $region61
    $region60: #{tpu_custom_call.1} parent=1 // pred_region
      %117 = dma.done [#allocation7], 64
    $region61: #{tpu_custom_call.1} parent=1 // pred_fallthru
      _
    // Predicated region
    $region62: #{tpu_custom_call.1} parent=1 // pred_check
      _
    $region63: #{tpu_custom_call.1} parent=1 // pred_check_branch
      %119 = sbr.rel (0) target = $region65
    $region64: #{tpu_custom_call.1} parent=1 // pred_region
      %121 = dma.done [#allocation10], 6144
    $region65: #{tpu_custom_call.1} parent=1 // pred_fallthru
      _
    // Predicated region
    $region66: #{tpu_custom_call.1} parent=1 // pred_check
      _
    $region67: #{tpu_custom_call.1} parent=1 // pred_check_branch
      %123 = sbr.rel (0) target = $region69
    $region68: #{tpu_custom_call.1} parent=1 // pred_region
      %125 = dma.done [#allocation10], 64
    $region69: #{tpu_custom_call.1} parent=1 // pred_fallthru
      _
    // Predicated region
    $region70: #{tpu_custom_call.1} parent=1 // pred_check
      _
    $region71: #{tpu_custom_call.1} parent=1 // pred_check_branch
      %127 = sbr.rel (0) target = $region73
    $region72: #{tpu_custom_call.1} parent=1 // pred_region
      %129 = dma.done [#allocation13], 2048
    $region73: #{tpu_custom_call.1} parent=1 // pred_fallthru
      _
    %v130 = vld [vmem:[#allocation4] sm:$0xff]
    %v131 = vld [vmem:[#allocation6] sm:$0xff]
    %v132 = vld [vmem:[#allocation6 + $0x8] sm:$0xff]
    %v133 = vld [vmem:[#allocation6 + $0x10] sm:$0xff]
    %v134 = vld [vmem:[#allocation6 + $0x18] sm:$0xff]
    %v135 = vld [vmem:[#allocation6 + $0x20] sm:$0xff]
    %v136 = vld [vmem:[#allocation6 + $0x28] sm:$0xff]
    %v137 = vld [vmem:[#allocation6 + $0x30] sm:$0xff]
    %v138 = vld [vmem:[#allocation6 + $0x38] sm:$0xff]
    %v139 = vld [vmem:[#allocation6 + $0x40] sm:$0xff]
    %v140 = vld [vmem:[#allocation6 + $0x48] sm:$0xff]
    %v141 = vld [vmem:[#allocation6 + $0x50] sm:$0xff]
    %v142 = vld [vmem:[#allocation6 + $0x58] sm:$0xff]
    %v143 = vld [vmem:[#allocation6 + $0x60] sm:$0xff]
    %v144 = vld [vmem:[#allocation6 + $0x68] sm:$0xff]
    %v145 = vld [vmem:[#allocation6 + $0x70] sm:$0xff]
    %v146 = vld [vmem:[#allocation6 + $0x78] sm:$0xff]
    %v147 = vld [vmem:[#allocation6 + $0x80] sm:$0xff]
    %v148 = vld [vmem:[#allocation6 + $0x88] sm:$0xff]
    %v149 = vld [vmem:[#allocation6 + $0x90] sm:$0xff]
    %v150 = vld [vmem:[#allocation6 + $0x98] sm:$0xff]
    %v151 = vld [vmem:[#allocation6 + $0xa0] sm:$0xff]
    %v152 = vld [vmem:[#allocation6 + $0xa8] sm:$0xff]
    %v153 = vld [vmem:[#allocation6 + $0xb0] sm:$0xff]
    %v154 = vld [vmem:[#allocation6 + $0xb8] sm:$0xff]
    %v155 = vld [vmem:[#allocation6 + $0xc0] sm:$0xff]
    %v156 = vld [vmem:[#allocation6 + $0xc8] sm:$0xff]
    %v157 = vld [vmem:[#allocation6 + $0xd0] sm:$0xff]
    %v158 = vld [vmem:[#allocation6 + $0xd8] sm:$0xff]
    %v159 = vld [vmem:[#allocation6 + $0xe0] sm:$0xff]
    %v160 = vld [vmem:[#allocation6 + $0xe8] sm:$0xff]
    %v161 = vld [vmem:[#allocation6 + $0xf0] sm:$0xff]
    %v162 = vld [vmem:[#allocation6 + $0xf8] sm:$0xff]
    %v163 = vld [vmem:[#allocation6 + $0x100] sm:$0xff]
    %v164 = vld [vmem:[#allocation6 + $0x108] sm:$0xff]
    %v165 = vld [vmem:[#allocation6 + $0x110] sm:$0xff]
    %v166 = vld [vmem:[#allocation6 + $0x118] sm:$0xff]
    %v167 = vld [vmem:[#allocation6 + $0x120] sm:$0xff]
    %v168 = vld [vmem:[#allocation6 + $0x128] sm:$0xff]
    %v169 = vld [vmem:[#allocation6 + $0x130] sm:$0xff]
    %v170 = vld [vmem:[#allocation6 + $0x138] sm:$0xff]
    %v171 = vld [vmem:[#allocation6 + $0x140] sm:$0xff]
    %v172 = vld [vmem:[#allocation6 + $0x148] sm:$0xff]
    %v173 = vld [vmem:[#allocation6 + $0x150] sm:$0xff]
    %v174 = vld [vmem:[#allocation6 + $0x158] sm:$0xff]
    %v175 = vld [vmem:[#allocation6 + $0x160] sm:$0xff]
    %v176 = vld [vmem:[#allocation6 + $0x168] sm:$0xff]
    %v177 = vld [vmem:[#allocation6 + $0x170] sm:$0xff]
    %v178 = vld [vmem:[#allocation6 + $0x178] sm:$0xff]
    %179 = vmatpush.msra.mxu0 %v176
    %180 = vmatpush.msra.mxu0 %v173
    %181 = vmatpush.msra.mxu0 %v170
    %182 = vmatpush.msra.mxu0 %v167
    %183 = vmatpush.msra.mxu0 %v164
    %184 = vmatpush.msra.mxu0 %v161
    %185 = vmatpush.msra.mxu0 %v158
    %186 = vmatpush.msra.mxu0 %v155
    %187 = vmatpush.msra.mxu0 %v152
    %188 = vmatpush.msra.mxu0 %v149
    %189 = vmatpush.msra.mxu0 %v146
    %190 = vmatpush.msra.mxu0 %v143
    %191 = vmatpush.msra.mxu0 %v140
    %192 = vmatpush.msra.mxu0 %v137
    %193 = vmatpush.msra.mxu0 %v134
    %194 = vmatpush.msra.mxu0 %v131
    %195 = vmatmul.f32.gmra.mxu0 %v130
    %v196 = vpop.f32.mrf.mxu0
    %v197 = vadd.f32 0.0, %v196
    %198 = vdwg.mxu0
    %199 = vmatpush.msra.mxu0 %v177
    %200 = vmatpush.msra.mxu0 %v174
    %201 = vmatpush.msra.mxu0 %v171
    %202 = vmatpush.msra.mxu0 %v168
    %203 = vmatpush.msra.mxu0 %v165
    %204 = vmatpush.msra.mxu0 %v162
    %205 = vmatpush.msra.mxu0 %v159
    %206 = vmatpush.msra.mxu0 %v156
    %207 = vmatpush.msra.mxu0 %v153
    %208 = vmatpush.msra.mxu0 %v150
    %209 = vmatpush.msra.mxu0 %v147
    %210 = vmatpush.msra.mxu0 %v144
    %211 = vmatpush.msra.mxu0 %v141
    %212 = vmatpush.msra.mxu0 %v138
    %213 = vmatpush.msra.mxu0 %v135
    %214 = vmatpush.msra.mxu0 %v132
    %215 = vmatmul.f32.gmra.mxu0 %v130
    %v216 = vpop.f32.mrf.mxu0
    %v217 = vadd.f32 0.0, %v216
    %218 = vdwg.mxu0
    %219 = vmatpush.msra.mxu0 %v178
    %220 = vmatpush.msra.mxu0 %v175
    %221 = vmatpush.msra.mxu0 %v172
    %222 = vmatpush.msra.mxu0 %v169
    %223 = vmatpush.msra.mxu0 %v166
    %224 = vmatpush.msra.mxu0 %v163
    %225 = vmatpush.msra.mxu0 %v160
    %226 = vmatpush.msra.mxu0 %v157
    %227 = vmatpush.msra.mxu0 %v154
    %228 = vmatpush.msra.mxu0 %v151
    %229 = vmatpush.msra.mxu0 %v148
    %230 = vmatpush.msra.mxu0 %v145
    %231 = vmatpush.msra.mxu0 %v142
    %232 = vmatpush.msra.mxu0 %v139
    %233 = vmatpush.msra.mxu0 %v136
    %234 = vmatpush.msra.mxu0 %v133
    %235 = vmatmul.f32.gmra.mxu0 %v130
    %v236 = vpop.f32.mrf.mxu0
    %v237 = vadd.f32 0.0, %v236
    %238 = vdwg.mxu0
    %v239 = vld [vmem:[%s5] sm:$0x1]
    %v240 = vld [vmem:[#allocation11] sm:$0x1]
    %v241 = vperm.slane %v197, 0
    %v242 = vsub.f32 %v197, %v241
    %v243 = vrot.slane %v242, 4
    %v244 = vadd.f32 %v242, %v243
    %v245 = vrot.slane %v244, 2
    %v246 = vadd.f32 %v244, %v245
    %v247 = vrot.slane %v246, 1
    %v248 = vadd.f32 %v246, %v247
    %v249 = vmul.f32 %v242, %v242
    %v250 = vrot.slane %v249, 4
    %v251 = vadd.f32 %v249, %v250
    %v252 = vrot.slane %v251, 2
    %v253 = vadd.f32 %v251, %v252
    %v254 = vrot.slane %v253, 1
    %v255 = vadd.f32 %v253, %v254
    %v256 = vmul.f32 %v248, 0.125
    %v257 = vmul.f32 %v255, 0.125
    %v258 = vmul.f32 %v256, %v256
    %v259 = vsub.f32 %v257, %v258
    %v260 = vmax.f32 %v259, 0.0
    %v261 = vsub.f32 %v242, %v256
    %v262 = vadd.f32 %v260, 1e-08
    %v263 = vrsqrt.pop %v262
    %v264 = vmul.f32 %v263, %v262
    %v265 = vmul.f32 %v264, %v263
    %v266 = vmul.f32 0.5, %v265
    %v267 = vsub.f32 1.5, %v266
    %v268 = vmul.f32 %v263, %v267
    %vm269 = vweird.f32 %v262
    %vm270 = vweird.f32 %v263
    %vm271 = vmor %vm269, %vm270
    %v272 = vsel %vm271, %v263, %v268
    %v273 = vmul.f32 %v261, %v272
    %v274 = vperm.slane %v239, 0
    %v275 = vmul.f32 %v273, %v274
    %v276 = vperm.slane %v240, 0
    %v277 = vadd.f32 %v275, %v276
    %v278 = vmax.f32 %v277, 0.0
    %v279 = vld [vmem:[#allocation9] sm:$0xff]
    %v280 = vld [vmem:[#allocation9 + $0x8] sm:$0xff]
    %v281 = vld [vmem:[#allocation9 + $0x10] sm:$0xff]
    %v282 = vld [vmem:[#allocation9 + $0x18] sm:$0xff]
    %v283 = vld [vmem:[#allocation9 + $0x20] sm:$0xff]
    %v284 = vld [vmem:[#allocation9 + $0x28] sm:$0xff]
    %v285 = vld [vmem:[#allocation9 + $0x30] sm:$0xff]
    %v286 = vld [vmem:[#allocation9 + $0x38] sm:$0xff]
    %v287 = vld [vmem:[#allocation9 + $0x40] sm:$0xff]
    %v288 = vld [vmem:[#allocation9 + $0x48] sm:$0xff]
    %v289 = vld [vmem:[#allocation9 + $0x50] sm:$0xff]
    %v290 = vld [vmem:[#allocation9 + $0x58] sm:$0xff]
    %v291 = vld [vmem:[#allocation9 + $0x60] sm:$0xff]
    %v292 = vld [vmem:[#allocation9 + $0x68] sm:$0xff]
    %v293 = vld [vmem:[#allocation9 + $0x70] sm:$0xff]
    %v294 = vld [vmem:[#allocation9 + $0x78] sm:$0xff]
    %295 = vmatpush.msra.mxu0 %v294
    %296 = vmatpush.msra.mxu0 %v293
    %297 = vmatpush.msra.mxu0 %v292
    %298 = vmatpush.msra.mxu0 %v291
    %299 = vmatpush.msra.mxu0 %v290
    %300 = vmatpush.msra.mxu0 %v289
    %301 = vmatpush.msra.mxu0 %v288
    %302 = vmatpush.msra.mxu0 %v287
    %303 = vmatpush.msra.mxu0 %v286
    %304 = vmatpush.msra.mxu0 %v285
    %305 = vmatpush.msra.mxu0 %v284
    %306 = vmatpush.msra.mxu0 %v283
    %307 = vmatpush.msra.mxu0 %v282
    %308 = vmatpush.msra.mxu0 %v281
    %309 = vmatpush.msra.mxu0 %v280
    %310 = vmatpush.msra.mxu0 %v279
    %311 = vmatmul.f32.gmra.mxu0 %v278
    %v312 = vpop.f32.mrf.mxu0
    %v313 = vadd.f32 0.0, %v312
    %314 = vdwg.mxu0
    %v315 = vld [vmem:[%s5 + $0x1] sm:$0x1]
    %v316 = vld [vmem:[#allocation11 + $0x1] sm:$0x1]
    %v317 = vperm.slane %v313, 0
    %v318 = vsub.f32 %v313, %v317
    %v319 = vrot.slane %v318, 4
    %v320 = vadd.f32 %v318, %v319
    %v321 = vrot.slane %v320, 2
    %v322 = vadd.f32 %v320, %v321
    %v323 = vrot.slane %v322, 1
    %v324 = vadd.f32 %v322, %v323
    %v325 = vmul.f32 %v318, %v318
    %v326 = vrot.slane %v325, 4
    %v327 = vadd.f32 %v325, %v326
    %v328 = vrot.slane %v327, 2
    %v329 = vadd.f32 %v327, %v328
    %v330 = vrot.slane %v329, 1
    %v331 = vadd.f32 %v329, %v330
    %v332 = vmul.f32 %v324, 0.125
    %v333 = vmul.f32 %v331, 0.125
    %v334 = vmul.f32 %v332, %v332
    %v335 = vsub.f32 %v333, %v334
    %v336 = vmax.f32 %v335, 0.0
    %v337 = vsub.f32 %v318, %v332
    %v338 = vadd.f32 %v336, 1e-08
    %v339 = vrsqrt.pop %v338
    %v340 = vmul.f32 %v339, %v338
    %v341 = vmul.f32 %v340, %v339
    %v342 = vmul.f32 0.5, %v341
    %v343 = vsub.f32 1.5, %v342
    %v344 = vmul.f32 %v339, %v343
    %vm345 = vweird.f32 %v338
    %vm346 = vweird.f32 %v339
    %vm347 = vmor %vm345, %vm346
    %v348 = vsel %vm347, %v339, %v344
    %v349 = vmul.f32 %v337, %v348
    %v350 = vperm.slane %v315, 0
    %v351 = vmul.f32 %v349, %v350
    %v352 = vperm.slane %v316, 0
    %v353 = vadd.f32 %v351, %v352
    %v354 = vmax.f32 %v353, 0.0
    %s355 = scalar_lea.vmem [#allocation9], 128
    %v356 = vld [vmem:[%s355] sm:$0xff]
    %v357 = vld [vmem:[%s355 + $0x8] sm:$0xff]
    %v358 = vld [vmem:[%s355 + $0x10] sm:$0xff]
    %v359 = vld [vmem:[%s355 + $0x18] sm:$0xff]
    %v360 = vld [vmem:[%s355 + $0x20] sm:$0xff]
    %v361 = vld [vmem:[%s355 + $0x28] sm:$0xff]
    %v362 = vld [vmem:[%s355 + $0x30] sm:$0xff]
    %v363 = vld [vmem:[%s355 + $0x38] sm:$0xff]
    %v364 = vld [vmem:[%s355 + $0x40] sm:$0xff]
    %v365 = vld [vmem:[%s355 + $0x48] sm:$0xff]
    %v366 = vld [vmem:[%s355 + $0x50] sm:$0xff]
    %v367 = vld [vmem:[%s355 + $0x58] sm:$0xff]
    %v368 = vld [vmem:[%s355 + $0x60] sm:$0xff]
    %v369 = vld [vmem:[%s355 + $0x68] sm:$0xff]
    %v370 = vld [vmem:[%s355 + $0x70] sm:$0xff]
    %v371 = vld [vmem:[%s355 + $0x78] sm:$0xff]
    %372 = vmatpush.msra.mxu0 %v371
    %373 = vmatpush.msra.mxu0 %v370
    %374 = vmatpush.msra.mxu0 %v369
    %375 = vmatpush.msra.mxu0 %v368
    %376 = vmatpush.msra.mxu0 %v367
    %377 = vmatpush.msra.mxu0 %v366
    %378 = vmatpush.msra.mxu0 %v365
    %379 = vmatpush.msra.mxu0 %v364
    %380 = vmatpush.msra.mxu0 %v363
    %381 = vmatpush.msra.mxu0 %v362
    %382 = vmatpush.msra.mxu0 %v361
    %383 = vmatpush.msra.mxu0 %v360
    %384 = vmatpush.msra.mxu0 %v359
    %385 = vmatpush.msra.mxu0 %v358
    %386 = vmatpush.msra.mxu0 %v357
    %387 = vmatpush.msra.mxu0 %v356
    %388 = vmatmul.f32.gmra.mxu0 %v354
    %v389 = vpop.f32.mrf.mxu0
    %v390 = vadd.f32 0.0, %v389
    %391 = vdwg.mxu0
    %392 = vst [vmem:[#allocation2] sm:$0xff] %v390
    %v393 = vld [vmem:[%s5 + $0x2] sm:$0x1]
    %v394 = vld [vmem:[#allocation11 + $0x2] sm:$0x1]
    %v395 = vperm.slane %v390, 0
    %v396 = vsub.f32 %v390, %v395
    %v397 = vrot.slane %v396, 4
    %v398 = vadd.f32 %v396, %v397
    %v399 = vrot.slane %v398, 2
    %v400 = vadd.f32 %v398, %v399
    %v401 = vrot.slane %v400, 1
    %v402 = vadd.f32 %v400, %v401
    %v403 = vmul.f32 %v396, %v396
    %v404 = vrot.slane %v403, 4
    %v405 = vadd.f32 %v403, %v404
    %v406 = vrot.slane %v405, 2
    %v407 = vadd.f32 %v405, %v406
    %v408 = vrot.slane %v407, 1
    %v409 = vadd.f32 %v407, %v408
    %v410 = vmul.f32 %v402, 0.125
    %v411 = vmul.f32 %v409, 0.125
    %v412 = vmul.f32 %v410, %v410
    %v413 = vsub.f32 %v411, %v412
    %v414 = vmax.f32 %v413, 0.0
    %v415 = vsub.f32 %v396, %v410
    %v416 = vadd.f32 %v414, 1e-08
    %v417 = vrsqrt.pop %v416
    %v418 = vmul.f32 %v417, %v416
    %v419 = vmul.f32 %v418, %v417
    %v420 = vmul.f32 0.5, %v419
    %v421 = vsub.f32 1.5, %v420
    %v422 = vmul.f32 %v417, %v421
    %vm423 = vweird.f32 %v416
    %vm424 = vweird.f32 %v417
    %vm425 = vmor %vm423, %vm424
    %v426 = vsel %vm425, %v417, %v422
    %v427 = vmul.f32 %v415, %v426
    %v428 = vperm.slane %v393, 0
    %v429 = vmul.f32 %v427, %v428
    %v430 = vperm.slane %v394, 0
    %v431 = vadd.f32 %v429, %v430
    %v432 = vmax.f32 %v431, 0.0
    %s433 = scalar_lea.vmem [#allocation9], 256
    %v434 = vld [vmem:[%s433] sm:$0xff]
    %v435 = vld [vmem:[%s433 + $0x8] sm:$0xff]
    %v436 = vld [vmem:[%s433 + $0x10] sm:$0xff]
    %v437 = vld [vmem:[%s433 + $0x18] sm:$0xff]
    %v438 = vld [vmem:[%s433 + $0x20] sm:$0xff]
    %v439 = vld [vmem:[%s433 + $0x28] sm:$0xff]
    %v440 = vld [vmem:[%s433 + $0x30] sm:$0xff]
    %v441 = vld [vmem:[%s433 + $0x38] sm:$0xff]
    %v442 = vld [vmem:[%s433 + $0x40] sm:$0xff]
    %v443 = vld [vmem:[%s433 + $0x48] sm:$0xff]
    %v444 = vld [vmem:[%s433 + $0x50] sm:$0xff]
    %v445 = vld [vmem:[%s433 + $0x58] sm:$0xff]
    %v446 = vld [vmem:[%s433 + $0x60] sm:$0xff]
    %v447 = vld [vmem:[%s433 + $0x68] sm:$0xff]
    %v448 = vld [vmem:[%s433 + $0x70] sm:$0xff]
    %v449 = vld [vmem:[%s433 + $0x78] sm:$0xff]
    %450 = vmatpush.msra.mxu0 %v449
    %451 = vmatpush.msra.mxu0 %v448
    %452 = vmatpush.msra.mxu0 %v447
    %453 = vmatpush.msra.mxu0 %v446
    %454 = vmatpush.msra.mxu0 %v445
    %455 = vmatpush.msra.mxu0 %v444
    %456 = vmatpush.msra.mxu0 %v443
    %457 = vmatpush.msra.mxu0 %v442
    %458 = vmatpush.msra.mxu0 %v441
    %459 = vmatpush.msra.mxu0 %v440
    %460 = vmatpush.msra.mxu0 %v439
    %461 = vmatpush.msra.mxu0 %v438
    %462 = vmatpush.msra.mxu0 %v437
    %463 = vmatpush.msra.mxu0 %v436
    %464 = vmatpush.msra.mxu0 %v435
    %465 = vmatpush.msra.mxu0 %v434
    %466 = vmatmul.f32.gmra.mxu0 %v432
    %v467 = vpop.f32.mrf.mxu0
    %v468 = vadd.f32 0.0, %v467
    %469 = vdwg.mxu0
    %v470 = vld [vmem:[%s5 + $0x3] sm:$0x1]
    %v471 = vld [vmem:[#allocation11 + $0x3] sm:$0x1]
    %v472 = vperm.slane %v468, 0
    %v473 = vsub.f32 %v468, %v472
    %v474 = vrot.slane %v473, 4
    %v475 = vadd.f32 %v473, %v474
    %v476 = vrot.slane %v475, 2
    %v477 = vadd.f32 %v475, %v476
    %v478 = vrot.slane %v477, 1
    %v479 = vadd.f32 %v477, %v478
    %v480 = vmul.f32 %v473, %v473
    %v481 = vrot.slane %v480, 4
    %v482 = vadd.f32 %v480, %v481
    %v483 = vrot.slane %v482, 2
    %v484 = vadd.f32 %v482, %v483
    %v485 = vrot.slane %v484, 1
    %v486 = vadd.f32 %v484, %v485
    %v487 = vmul.f32 %v479, 0.125
    %v488 = vmul.f32 %v486, 0.125
    %v489 = vmul.f32 %v487, %v487
    %v490 = vsub.f32 %v488, %v489
    %v491 = vmax.f32 %v490, 0.0
    %v492 = vsub.f32 %v473, %v487
    %v493 = vadd.f32 %v491, 1e-08
    %v494 = vrsqrt.pop %v493
    %v495 = vmul.f32 %v494, %v493
    %v496 = vmul.f32 %v495, %v494
    %v497 = vmul.f32 0.5, %v496
    %v498 = vsub.f32 1.5, %v497
    %v499 = vmul.f32 %v494, %v498
    %vm500 = vweird.f32 %v493
    %vm501 = vweird.f32 %v494
    %vm502 = vmor %vm500, %vm501
    %v503 = vsel %vm502, %v494, %v499
    %v504 = vmul.f32 %v492, %v503
    %v505 = vperm.slane %v470, 0
    %v506 = vmul.f32 %v504, %v505
    %v507 = vperm.slane %v471, 0
    %v508 = vadd.f32 %v506, %v507
    %v509 = vmax.f32 %v508, 0.0
    %v510 = vld [vmem:[#allocation8] sm:$0x1]
    %v511 = vperm.slane %v510, 0
    %v512 = vmul.f32 %v509, %v511
    %v513 = vadd.f32 %v512, 0.0
    %v514 = vld [vmem:[%s8] sm:$0x1]
    %v515 = vld [vmem:[%s9] sm:$0x1]
    %v516 = vperm.slane %v217, 0
    %v517 = vsub.f32 %v217, %v516
    %v518 = vrot.slane %v517, 4
    %v519 = vadd.f32 %v517, %v518
    %v520 = vrot.slane %v519, 2
    %v521 = vadd.f32 %v519, %v520
    %v522 = vrot.slane %v521, 1
    %v523 = vadd.f32 %v521, %v522
    %v524 = vmul.f32 %v517, %v517
    %v525 = vrot.slane %v524, 4
    %v526 = vadd.f32 %v524, %v525
    %v527 = vrot.slane %v526, 2
    %v528 = vadd.f32 %v526, %v527
    %v529 = vrot.slane %v528, 1
    %v530 = vadd.f32 %v528, %v529
    %v531 = vmul.f32 %v523, 0.125
    %v532 = vmul.f32 %v530, 0.125
    %v533 = vmul.f32 %v531, %v531
    %v534 = vsub.f32 %v532, %v533
    %v535 = vmax.f32 %v534, 0.0
    %v536 = vsub.f32 %v517, %v531
    %v537 = vadd.f32 %v535, 1e-08
    %v538 = vrsqrt.pop %v537
    %v539 = vmul.f32 %v538, %v537
    %v540 = vmul.f32 %v539, %v538
    %v541 = vmul.f32 0.5, %v540
    %v542 = vsub.f32 1.5, %v541
    %v543 = vmul.f32 %v538, %v542
    %vm544 = vweird.f32 %v537
    %vm545 = vweird.f32 %v538
    %vm546 = vmor %vm544, %vm545
    %v547 = vsel %vm546, %v538, %v543
    %v548 = vmul.f32 %v536, %v547
    %v549 = vperm.slane %v514, 0
    %v550 = vmul.f32 %v548, %v549
    %v551 = vperm.slane %v515, 0
    %v552 = vadd.f32 %v550, %v551
    %v553 = vmax.f32 %v552, 0.0
    %v554 = vld [vmem:[#allocation12] sm:$0xff]
    %v555 = vld [vmem:[#allocation12 + $0x8] sm:$0xff]
    %v556 = vld [vmem:[#allocation12 + $0x10] sm:$0xff]
    %v557 = vld [vmem:[#allocation12 + $0x18] sm:$0xff]
    %v558 = vld [vmem:[#allocation12 + $0x20] sm:$0xff]
    %v559 = vld [vmem:[#allocation12 + $0x28] sm:$0xff]
    %v560 = vld [vmem:[#allocation12 + $0x30] sm:$0xff]
    %v561 = vld [vmem:[#allocation12 + $0x38] sm:$0xff]
    %v562 = vld [vmem:[#allocation12 + $0x40] sm:$0xff]
    %v563 = vld [vmem:[#allocation12 + $0x48] sm:$0xff]
    %v564 = vld [vmem:[#allocation12 + $0x50] sm:$0xff]
    %v565 = vld [vmem:[#allocation12 + $0x58] sm:$0xff]
    %v566 = vld [vmem:[#allocation12 + $0x60] sm:$0xff]
    %v567 = vld [vmem:[#allocation12 + $0x68] sm:$0xff]
    %v568 = vld [vmem:[#allocation12 + $0x70] sm:$0xff]
    %v569 = vld [vmem:[#allocation12 + $0x78] sm:$0xff]
    %v570 = vld [vmem:[#allocation2] sm:$0xff]
    %571 = vmatpush.msra.mxu0 %v569
    %572 = vmatpush.msra.mxu0 %v568
    %573 = vmatpush.msra.mxu0 %v567
    %574 = vmatpush.msra.mxu0 %v566
    %575 = vmatpush.msra.mxu0 %v565
    %576 = vmatpush.msra.mxu0 %v564
    %577 = vmatpush.msra.mxu0 %v563
    %578 = vmatpush.msra.mxu0 %v562
    %579 = vmatpush.msra.mxu0 %v561
    %580 = vmatpush.msra.mxu0 %v560
    %581 = vmatpush.msra.mxu0 %v559
    %582 = vmatpush.msra.mxu0 %v558
    %583 = vmatpush.msra.mxu0 %v557
    %584 = vmatpush.msra.mxu0 %v556
    %585 = vmatpush.msra.mxu0 %v555
    %586 = vmatpush.msra.mxu0 %v554
    %587 = vmatmul.f32.gmra.mxu0 %v553
    %v588 = vpop.f32.mrf.mxu0
    %v589 = vadd.f32 %v570, %v588
    %590 = vdwg.mxu0
    %v591 = vld [vmem:[%s8 + $0x1] sm:$0x1]
    %v592 = vld [vmem:[%s9 + $0x1] sm:$0x1]
    %v593 = vperm.slane %v589, 0
    %v594 = vsub.f32 %v589, %v593
    %v595 = vrot.slane %v594, 4
    %v596 = vadd.f32 %v594, %v595
    %v597 = vrot.slane %v596, 2
    %v598 = vadd.f32 %v596, %v597
    %v599 = vrot.slane %v598, 1
    %v600 = vadd.f32 %v598, %v599
    %v601 = vmul.f32 %v594, %v594
    %v602 = vrot.slane %v601, 4
    %v603 = vadd.f32 %v601, %v602
    %v604 = vrot.slane %v603, 2
    %v605 = vadd.f32 %v603, %v604
    %v606 = vrot.slane %v605, 1
    %v607 = vadd.f32 %v605, %v606
    %v608 = vmul.f32 %v600, 0.125
    %v609 = vmul.f32 %v607, 0.125
    %v610 = vmul.f32 %v608, %v608
    %v611 = vsub.f32 %v609, %v610
    %v612 = vmax.f32 %v611, 0.0
    %v613 = vsub.f32 %v594, %v608
    %v614 = vadd.f32 %v612, 1e-08
    %v615 = vrsqrt.pop %v614
    %v616 = vmul.f32 %v615, %v614
    %v617 = vmul.f32 %v616, %v615
    %v618 = vmul.f32 0.5, %v617
    %v619 = vsub.f32 1.5, %v618
    %v620 = vmul.f32 %v615, %v619
    %vm621 = vweird.f32 %v614
    %vm622 = vweird.f32 %v615
    %vm623 = vmor %vm621, %vm622
    %v624 = vsel %vm623, %v615, %v620
    %v625 = vmul.f32 %v613, %v624
    %v626 = vperm.slane %v591, 0
    %v627 = vmul.f32 %v625, %v626
    %v628 = vperm.slane %v592, 0
    %v629 = vadd.f32 %v627, %v628
    %v630 = vmax.f32 %v629, 0.0
    %v631 = vld [vmem:[#allocation8 + $0x1] sm:$0x1]
    %v632 = vperm.slane %v631, 0
    %v633 = vmul.f32 %v630, %v632
    %v634 = vadd.f32 %v513, %v633
    %v635 = vld [vmem:[%s10] sm:$0x1]
    %v636 = vld [vmem:[%s11] sm:$0x1]
    %v637 = vperm.slane %v237, 0
    %v638 = vsub.f32 %v237, %v637
    %v639 = vrot.slane %v638, 4
    %v640 = vadd.f32 %v638, %v639
    %v641 = vrot.slane %v640, 2
    %v642 = vadd.f32 %v640, %v641
    %v643 = vrot.slane %v642, 1
    %v644 = vadd.f32 %v642, %v643
    %v645 = vmul.f32 %v638, %v638
    %v646 = vrot.slane %v645, 4
    %v647 = vadd.f32 %v645, %v646
    %v648 = vrot.slane %v647, 2
    %v649 = vadd.f32 %v647, %v648
    %v650 = vrot.slane %v649, 1
    %v651 = vadd.f32 %v649, %v650
    %v652 = vmul.f32 %v644, 0.125
    %v653 = vmul.f32 %v651, 0.125
    %v654 = vmul.f32 %v652, %v652
    %v655 = vsub.f32 %v653, %v654
    %v656 = vmax.f32 %v655, 0.0
    %v657 = vsub.f32 %v638, %v652
    %v658 = vadd.f32 %v656, 1e-08
    %v659 = vrsqrt.pop %v658
    %v660 = vmul.f32 %v659, %v658
    %v661 = vmul.f32 %v660, %v659
    %v662 = vmul.f32 0.5, %v661
    %v663 = vsub.f32 1.5, %v662
    %v664 = vmul.f32 %v659, %v663
    %vm665 = vweird.f32 %v658
    %vm666 = vweird.f32 %v659
    %vm667 = vmor %vm665, %vm666
    %v668 = vsel %vm667, %v659, %v664
    %v669 = vmul.f32 %v657, %v668
    %v671 = vperm.slane %v635, 0
    %v673 = vmul.f32 %v669, %v671
    %v675 = vperm.slane %v636, 0
    %v677 = vadd.f32 %v673, %v675
    %v678 = vmax.f32 %v677, 0.0
    %v679 = vld [vmem:[#allocation8 + $0x2] sm:$0x1]
    %v680 = vperm.slane %v679, 0
    %v681 = vmul.f32 %v678, %v680
    %v682 = vadd.f32 %v634, %v681
    %683 = vadd.xlane.f32.xlu0 %v682
    %v684 = vpop.xlane.xlu0 %683
    %s685 = sld [smem:[#allocation3]]
    %v686 = vstv %s685
    %v687 = vadd.f32 %v684, %v686
    %vm688 = vcmask 7168
    %689 = vst.msk [vmem:[%s12] sm:$0xff] %vm688, %v687
    // Predicated region
    $region74: #{tpu_custom_call.1} parent=1 // pred_check
      _
    $region75: #{tpu_custom_call.1} parent=1 // pred_check_branch
      %691 = sbr.rel (0) target = $region77
    $region76: #{tpu_custom_call.1} parent=1 // pred_region
      _
    $region77: #{tpu_custom_call.1} parent=1 // pred_fallthru
      _
    // Predicated region
    $region78: #{tpu_custom_call.1} parent=1 // pred_check
      _
    $region79: #{tpu_custom_call.1} parent=1 // pred_check_branch
      %693 = sbr.rel (0) target = $region81
    $region80: #{tpu_custom_call.1} parent=1 // pred_region
      _
    $region81: #{tpu_custom_call.1} parent=1 // pred_fallthru
      _
    %694 = vsyncpa [#allocation5], 1
    %695 = vsyncpa [#allocation7], 1
    %696 = vsyncpa [#allocation10], 1
    %697 = vsyncpa [#allocation13], 1

</llo_original>
